<compile_context>
chip_gen: v5e
topology: v5e:2x2
jax: 0.10.0
libtpu: 0.0.40
codegen_flags: <defaults>
</compile_context>

<pallas_src>
import functools

import jax
import jax.numpy as jnp
from jax.experimental import pallas as pl
from jax.experimental.pallas import tpu as pltpu


def _backproject_kernel(invk_ref, depth_ref, out_ref, *, width, tile_n):
    # invk_ref : (B, 9)      SMEM, row-major top-left 3x3 of inv_K
    # depth_ref: (1, tile_n) VMEM depth tile (batch dim squeezed away)
    # out_ref  : (4, tile_n) VMEM cam_points tile (batch dim squeezed away)
    b = pl.program_id(0)
    n0 = pl.program_id(1) * tile_n

    # In-kernel pixel coordinates: flat index -> (x, y).
    idx = jax.lax.broadcasted_iota(jnp.int32, (1, tile_n), 1) + n0
    if (width & (width - 1)) == 0:            # power-of-two width: shift/mask
        x = (idx & (width - 1)).astype(jnp.float32)
        y = (idx >> (width.bit_length() - 1)).astype(jnp.float32)
    else:
        x = (idx % width).astype(jnp.float32)
        y = (idx // width).astype(jnp.float32)

    # Nine scalar reads from SMEM; broadcast FMAs on the VPU (MXU not used).
    k00 = invk_ref[b, 0]; k01 = invk_ref[b, 1]; k02 = invk_ref[b, 2]
    k10 = invk_ref[b, 3]; k11 = invk_ref[b, 4]; k12 = invk_ref[b, 5]
    k20 = invk_ref[b, 6]; k21 = invk_ref[b, 7]; k22 = invk_ref[b, 8]

    d = depth_ref[...]                         # (1, tile_n)
    out_ref[0:1, :] = d * (k00 * x + k01 * y + k02)
    out_ref[1:2, :] = d * (k10 * x + k11 * y + k12)
    out_ref[2:3, :] = d * (k20 * x + k21 * y + k22)
    out_ref[3:4, :] = jnp.ones_like(d)


def backproject_depth(depth, inv_K, *, tile_n=8192):
    """depth: (B, 1, H, W), inv_K: (B, 4, 4). Returns (B, 4, H*W) float32."""
    B, _, H, W = depth.shape
    N = H * W

    # Lane-aligned tile, no larger than the (128-padded) problem size.
    n_pad = pl.cdiv(N, 128) * 128
    tile_n = max(128, min(int(tile_n), n_pad))
    tile_n = (tile_n // 128) * 128

    depth_flat = depth.reshape(B, 1, N).astype(jnp.float32)
    invk_flat = inv_K[:, :3, :3].reshape(B, 9).astype(jnp.float32)

    grid = (B, pl.cdiv(N, tile_n))             # ragged last tile is masked
    kernel = functools.partial(_backproject_kernel, width=W, tile_n=tile_n)
    return pl.pallas_call(
        kernel,
        out_shape=jax.ShapeDtypeStruct((B, 4, N), jnp.float32),
        grid_spec=pltpu.PrefetchScalarGridSpec(
            num_scalar_prefetch=0,
            grid=grid,
            in_specs=[
                # Whole (B, 9) inv_K table resident in SMEM (scalar reads).
                pl.BlockSpec(memory_space=pltpu.MemorySpace.SMEM),
                pl.BlockSpec((None, 1, tile_n), lambda b, n: (b, 0, n)),
            ],
            out_specs=pl.BlockSpec((None, 4, tile_n), lambda b, n: (b, 0, n)),
        ),
        compiler_params=pltpu.CompilerParams(
            dimension_semantics=("parallel", "parallel")),
    )(invk_flat, depth_flat)


def make_pix_coords(batch_size, height, width):
    """Deterministic buffer matching the PyTorch module's pix_coords."""
    xs = jnp.arange(width, dtype=jnp.float32)
    ys = jnp.arange(height, dtype=jnp.float32)
    xg, yg = jnp.meshgrid(xs, ys, indexing="xy")       # each (H, W)
    pix = jnp.stack([xg.reshape(-1), yg.reshape(-1),
                     jnp.ones(height * width, dtype=jnp.float32)], axis=0)
    return jnp.broadcast_to(pix[None], (batch_size, 3, height * width))


def backproject_depth_ref(depth, inv_K):
    B, _, H, W = depth.shape
    N = H * W
    pix = make_pix_coords(B, H, W)
    cam = jnp.einsum("bij,bjn->bin", inv_K[:, :3, :3], pix)
    cam = depth.reshape(B, 1, N) * cam
    ones = jnp.ones((B, 1, N), dtype=jnp.float32)
    return jnp.concatenate([cam, ones], axis=1)


if __name__ == "__main__":
    B, H, W = 2, 16, 16
    key = jax.random.PRNGKey(0)
    k_d, k_k = jax.random.split(key)

    depth = jax.random.uniform(k_d, (B, 1, H, W), dtype=jnp.float32,
                               minval=0.1, maxval=10.0)
    # A plausible deterministic inverse-intrinsics-like 4x4 per batch.
    inv_K = (jnp.eye(4, dtype=jnp.float32)[None].repeat(B, axis=0)
             + 0.01 * jax.random.normal(k_k, (B, 4, 4), dtype=jnp.float32))

    ref = backproject_depth_ref(depth, inv_K)

    # Default path: one large lane-dense tile per batch at this size.
    out = jax.block_until_ready(backproject_depth(depth, inv_K))
    assert out.shape == (B, 4, H * W)
    assert jnp.allclose(out, ref, atol=1e-4, rtol=1e-4), "mismatch vs reference"

    # Multi-tile path: exercises the in-kernel iota + grid-offset coordinates.
    out_small = jax.block_until_ready(
        backproject_depth(depth, inv_K, tile_n=128))
    assert jnp.allclose(out_small, ref, atol=1e-4, rtol=1e-4), \
        "mismatch vs reference (tiled)"

    print("KERNEL_OK")
</pallas_src>

<mosaic_0001>
module attributes {stable_mosaic.version = 11 : i64} {
  func.func @_backproject_kernel(%arg0: i32, %arg1: i32, %arg2: memref<2x9xf32, #tpu.memory_space<smem>>, %arg3: memref<1x1x256xf32, #tpu.memory_space<vmem>>, %arg4: memref<1x4x256xf32, #tpu.memory_space<vmem>>) attributes {dimension_semantics = [#tpu.dimension_semantics<parallel>, #tpu.dimension_semantics<parallel>], iteration_bounds = array<i64: 2, 1>, scalar_prefetch = 0 : i64, scratch_operands = 0 : i64, tpu.core_type = #tpu.core_type<tc>, window_params = [{transform_indices = @transform_0, window_bounds = array<i64: 2, 9>}, {transform_indices = @transform_1, window_bounds = array<i64: 1, 1, 256>}, {transform_indices = @transform_2, window_bounds = array<i64: 1, 4, 256>}]} {
    %c256_i32 = arith.constant 256 : i32
    %0 = arith.muli %arg1, %c256_i32 : i32
    %1 = tpu.iota {dimensions = array<i32: 1>} : vector<1x256xi32>
    %2 = vector.broadcast %0 : i32 to vector<1x256xi32>
    %3 = arith.addi %1, %2 : vector<1x256xi32>
    %c15_i32 = arith.constant 15 : i32
    %4 = vector.broadcast %c15_i32 : i32 to vector<1x256xi32>
    %5 = arith.andi %3, %4 : vector<1x256xi32>
    %6 = arith.sitofp %5 : vector<1x256xi32> to vector<1x256xf32>
    %c4_i32 = arith.constant 4 : i32
    %7 = vector.broadcast %c4_i32 : i32 to vector<1x256xi32>
    %8 = arith.shrsi %3, %7 : vector<1x256xi32>
    %9 = arith.sitofp %8 : vector<1x256xi32> to vector<1x256xf32>
    %10 = arith.index_cast %arg0 : i32 to index
    %c0 = arith.constant 0 : index
    %11 = memref.load %arg2[%10, %c0] : memref<2x9xf32, #tpu.memory_space<smem>>
    %12 = arith.index_cast %arg0 : i32 to index
    %c1 = arith.constant 1 : index
    %13 = memref.load %arg2[%12, %c1] : memref<2x9xf32, #tpu.memory_space<smem>>
    %14 = arith.index_cast %arg0 : i32 to index
    %c2 = arith.constant 2 : index
    %15 = memref.load %arg2[%14, %c2] : memref<2x9xf32, #tpu.memory_space<smem>>
    %16 = arith.index_cast %arg0 : i32 to index
    %c3 = arith.constant 3 : index
    %17 = memref.load %arg2[%16, %c3] : memref<2x9xf32, #tpu.memory_space<smem>>
    %18 = arith.index_cast %arg0 : i32 to index
    %c4 = arith.constant 4 : index
    %19 = memref.load %arg2[%18, %c4] : memref<2x9xf32, #tpu.memory_space<smem>>
    %20 = arith.index_cast %arg0 : i32 to index
    %c5 = arith.constant 5 : index
    %21 = memref.load %arg2[%20, %c5] : memref<2x9xf32, #tpu.memory_space<smem>>
    %22 = arith.index_cast %arg0 : i32 to index
    %c6 = arith.constant 6 : index
    %23 = memref.load %arg2[%22, %c6] : memref<2x9xf32, #tpu.memory_space<smem>>
    %24 = arith.index_cast %arg0 : i32 to index
    %c7 = arith.constant 7 : index
    %25 = memref.load %arg2[%24, %c7] : memref<2x9xf32, #tpu.memory_space<smem>>
    %26 = arith.index_cast %arg0 : i32 to index
    %c8 = arith.constant 8 : index
    %27 = memref.load %arg2[%26, %c8] : memref<2x9xf32, #tpu.memory_space<smem>>
    %c0_0 = arith.constant 0 : index
    %c0_1 = arith.constant 0 : index
    %c0_2 = arith.constant 0 : index
    %28 = vector.load %arg3[%c0_0, %c0_1, %c0_2] : memref<1x1x256xf32, #tpu.memory_space<vmem>>, vector<1x1x256xf32>
    %29 = vector.shape_cast %28 : vector<1x1x256xf32> to vector<1x256xf32>
    %30 = vector.broadcast %11 : f32 to vector<1x256xf32>
    %31 = arith.mulf %30, %6 : vector<1x256xf32>
    %32 = vector.broadcast %13 : f32 to vector<1x256xf32>
    %33 = arith.mulf %32, %9 : vector<1x256xf32>
    %34 = arith.addf %31, %33 : vector<1x256xf32>
    %35 = vector.broadcast %15 : f32 to vector<1x256xf32>
    %36 = arith.addf %34, %35 : vector<1x256xf32>
    %37 = arith.mulf %29, %36 : vector<1x256xf32>
    %c0_3 = arith.constant 0 : index
    %c0_4 = arith.constant 0 : index
    %c0_5 = arith.constant 0 : index
    %38 = vector.load %arg4[%c0_3, %c0_4, %c0_5] : memref<1x4x256xf32, #tpu.memory_space<vmem>>, vector<1x1x256xf32>
    %39 = vector.shape_cast %38 : vector<1x1x256xf32> to vector<1x256xf32>
    %40 = vector.shape_cast %37 : vector<1x256xf32> to vector<1x1x256xf32>
    tpu.vector_store %arg4[%c0_3, %c0_4, %c0_5], %40 {strides = array<i32>} : memref<1x4x256xf32, #tpu.memory_space<vmem>>, vector<1x1x256xf32>,
    %41 = vector.broadcast %17 : f32 to vector<1x256xf32>
    %42 = arith.mulf %41, %6 : vector<1x256xf32>
    %43 = vector.broadcast %19 : f32 to vector<1x256xf32>
    %44 = arith.mulf %43, %9 : vector<1x256xf32>
    %45 = arith.addf %42, %44 : vector<1x256xf32>
    %46 = vector.broadcast %21 : f32 to vector<1x256xf32>
    %47 = arith.addf %45, %46 : vector<1x256xf32>
    %48 = arith.mulf %29, %47 : vector<1x256xf32>
    %c0_6 = arith.constant 0 : index
    %c1_7 = arith.constant 1 : index
    %c0_8 = arith.constant 0 : index
    %49 = vector.load %arg4[%c0_6, %c1_7, %c0_8] : memref<1x4x256xf32, #tpu.memory_space<vmem>>, vector<1x1x256xf32>
    %50 = vector.shape_cast %49 : vector<1x1x256xf32> to vector<1x256xf32>
    %51 = vector.shape_cast %48 : vector<1x256xf32> to vector<1x1x256xf32>
    tpu.vector_store %arg4[%c0_6, %c1_7, %c0_8], %51 {strides = array<i32>} : memref<1x4x256xf32, #tpu.memory_space<vmem>>, vector<1x1x256xf32>,
    %52 = vector.broadcast %23 : f32 to vector<1x256xf32>
    %53 = arith.mulf %52, %6 : vector<1x256xf32>
    %54 = vector.broadcast %25 : f32 to vector<1x256xf32>
    %55 = arith.mulf %54, %9 : vector<1x256xf32>
    %56 = arith.addf %53, %55 : vector<1x256xf32>
    %57 = vector.broadcast %27 : f32 to vector<1x256xf32>
    %58 = arith.addf %56, %57 : vector<1x256xf32>
    %59 = arith.mulf %29, %58 : vector<1x256xf32>
    %c0_9 = arith.constant 0 : index
    %c2_10 = arith.constant 2 : index
    %c0_11 = arith.constant 0 : index
    %60 = vector.load %arg4[%c0_9, %c2_10, %c0_11] : memref<1x4x256xf32, #tpu.memory_space<vmem>>, vector<1x1x256xf32>
    %61 = vector.shape_cast %60 : vector<1x1x256xf32> to vector<1x256xf32>
    %62 = vector.shape_cast %59 : vector<1x256xf32> to vector<1x1x256xf32>
    tpu.vector_store %arg4[%c0_9, %c2_10, %c0_11], %62 {strides = array<i32>} : memref<1x4x256xf32, #tpu.memory_space<vmem>>, vector<1x1x256xf32>,
    %cst = arith.constant 1.000000e+00 : f32
    %63 = vector.broadcast %cst : f32 to vector<1x256xf32>
    %c0_12 = arith.constant 0 : index
    %c3_13 = arith.constant 3 : index
    %c0_14 = arith.constant 0 : index
    %64 = vector.load %arg4[%c0_12, %c3_13, %c0_14] : memref<1x4x256xf32, #tpu.memory_space<vmem>>, vector<1x1x256xf32>
    %65 = vector.shape_cast %64 : vector<1x1x256xf32> to vector<1x256xf32>
    %66 = vector.shape_cast %63 : vector<1x256xf32> to vector<1x1x256xf32>
    tpu.vector_store %arg4[%c0_12, %c3_13, %c0_14], %66 {strides = array<i32>} : memref<1x4x256xf32, #tpu.memory_space<vmem>>, vector<1x1x256xf32>,
    return
  }
  func.func @transform_0(%arg0: i32, %arg1: i32) -> (i32, i32) {
    %c0_i32 = arith.constant 0 : i32
    %c0_i32_0 = arith.constant 0 : i32
    %c0_i32_1 = arith.constant 0 : i32
    return %c0_i32, %c0_i32_0 : i32, i32
  }
  func.func @transform_1(%arg0: i32, %arg1: i32) -> (i32, i32, i32) {
    %c0_i32 = arith.constant 0 : i32
    %c0_i32_0 = arith.constant 0 : i32
    return %arg0, %c0_i32, %arg1 : i32, i32, i32
  }
  func.func @transform_2(%arg0: i32, %arg1: i32) -> (i32, i32, i32) {
    %c0_i32 = arith.constant 0 : i32
    %c0_i32_0 = arith.constant 0 : i32
    return %arg0, %c0_i32, %arg1 : i32, i32, i32
  }
}

</mosaic_0001>

<llo_original>
// kernel: tpu_custom_call.1
$region0: #{tpu_custom_call.1}
  #allocation0 [shape = 'u32[]', space=smem, size = 0x4, offset = 0x4, fixed_abs, tag = 'smem constant byte address 0x4 - core index']
  #allocation1 [shape = 'u32[72,128]{1,0:T(1,128)}', space=vmem, size = 0x9000, scoped, tag = 'internal scratch']
  %s0 = inlined_call_operand.hbm [shape: f32[2,9], index: 0, kind: input, shape index: {}]
  %s1 = inlined_call_operand.hbm [shape: f32[2,1,256], index: 1, kind: input, shape index: {}]
  %s2 = inlined_call_operand.hbm [shape: f32[2,4,256], index: 2, kind: output, shape index: {}]
  %s3 = sld [smem:[#allocation0]]
  $region49: #{tpu_custom_call.1} parent=0
    _
  %s5 = ssub.s32 1, %s3
  %s6 = scalar_select 0, %s5, %s3
  $region1: #{tpu_custom_call.1} parent=0
    #allocation2 [shape = 'u8[1024]{0}', space=smem, size = 0x400, scoped, tag = 'input window, operand 0, single buffered']
    #allocation3 [shape = 's32[2]{0}', space=sflag, size = 0x8, scoped, tag = 'scoped memory for tpu_custom_call.1']
    #allocation4 [shape = 's32[2]{0}', space=sflag, size = 0x8, scoped, tag = 'scoped memory for tpu_custom_call.1']
    #allocation5 [shape = 's32[2]{0}', space=sflag, size = 0x8, scoped, tag = 'scoped memory for tpu_custom_call.1']
    #allocation6 [shape = 'u8[2048]{0}', space=vmem, size = 0x800, scoped, tag = 'input window, operand 1']
    #allocation7 [shape = 'u8[8192]{0}', space=vmem, size = 0x2000, scoped, tag = 'output window, operand 0']
    %7 = vsyncpa [#allocation5], 0
    %8 = vsyncpa [#allocation3], 0
    %s9 = scalar_lea.sflag [#allocation3], 1
    %10 = vsyncpa %s9, 0
    %11 = vsyncpa [#allocation4], 0
    %s12 = scalar_lea.sflag [#allocation4], 1
    %13 = vsyncpa %s12, 0
    loop: start=0, step=1, limit=4
    $region2: #{tpu_custom_call.1} parent=1 // loop_pre_header
      _
    $region3: #{tpu_custom_call.1} parent=1 // loop_header
      %s15 = sphi 0, %s19
      %p16 = scmp.ge.s32.totalorder %s15, 4
      %s22 = sphi 0, %s34
      %s23 = sphi 0, %s30
      %s24 = sphi 0, %s22
      %s25 = sphi 0, %s23
      %s26 = sphi 0, %s24
      %s27 = sphi 0, %s25
      %s35 = sphi 0, %s35
      %s37 = sphi 0, %s35
      %s38 = sphi 0, %s37
      %s52 = sphi 0, %s38
      %s60 = sphi 0, %s62
      %s63 = sphi 0, %s60
      %s64 = sphi 0, %s63
      %s80 = sphi 0, %s64
      %s88 = sphi 0, %s90
      %s91 = sphi 0, %s88
      %s92 = sphi 0, %s91
      %s108 = sphi 0, %s92
    $region4: #{tpu_custom_call.1} parent=1 // loop_header_branch
      %18 = sbr.rel (%p16) target = $region8
    $region5: #{tpu_custom_call.1} parent=1 // loop_body
      %s20 = ssub.s32 %s15, 1
      %s21 = ssub.s32 %s15, 2
      %s28 = sadd.s32 1, %s23
      %p29 = scmp.ge.s32.totalorder %s28, 1
      %s30 = scalar_select %p29, 0, %s28
      %s31 = sadd.s32 1, %s22
      %s32 = scalar_select %p29, %s31, %s22
      %p33 = scmp.ge.s32.totalorder %s32, 2
      %s34 = scalar_select %p33, 0, %s32
      %s36 = sadd.s32 %s35, 1
      %p39 = scmp.eq.s32.totalorder %s15, 1
      %p40 = scmp.ne.s32.totalorder %s35, %s37
      %p41 = scmp.eq.s32.totalorder %s15, 0
      %p42 = por %p40, %p41
      %p43 = scmp.ne.s32.totalorder %s35, %s37
      %p44 = scmp.eq.s32.totalorder %s20, 1
      %p45 = por %p43, %p44
      %p46 = scmp.ne.s32.totalorder %s37, %s38
      %p47 = scmp.eq.s32.totalorder %s20, 0
      %p48 = por %p46, %p47
      %p49 = scmp.ne.s32.totalorder %s37, %s38
      %p50 = scmp.eq.s32.totalorder %s21, 1
      %p51 = por %p49, %p50
      %p53 = scmp.ne.s32.totalorder %s38, %s52
      %p54 = scmp.eq.s32.totalorder %s21, 0
      %p55 = por %p53, %p54
      %s56 = ssub.s32 %s22, %s34
      %s57 = ssub.s32 %s23, %s30
      %s58 = sor.u32 %s56, %s57
      %p59 = scmp.eq.s32.totalorder %s58, 0
      %s61 = sadd.s32 %s60, 1
      %s62 = scalar_select %p59, %s60, %s61
      %p65 = pneg %p59
      %p66 = scmp.eq.s32.totalorder %s15, 1
      %p67 = por %p65, %p66
      %p68 = scmp.ne.s32.totalorder %s60, %s63
      %p69 = scmp.eq.s32.totalorder %s15, 0
      %p70 = por %p68, %p69
      %p71 = scmp.ne.s32.totalorder %s60, %s63
      %p72 = scmp.eq.s32.totalorder %s20, 1
      %p73 = por %p71, %p72
      %p74 = scmp.ne.s32.totalorder %s63, %s64
      %p75 = scmp.eq.s32.totalorder %s20, 0
      %p76 = por %p74, %p75
      %p77 = scmp.ne.s32.totalorder %s63, %s64
      %p78 = scmp.eq.s32.totalorder %s21, 1
      %p79 = por %p77, %p78
      %p81 = scmp.ne.s32.totalorder %s64, %s80
      %p82 = scmp.eq.s32.totalorder %s21, 0
      %p83 = por %p81, %p82
      %s84 = ssub.s32 %s22, %s34
      %s85 = ssub.s32 %s23, %s30
      %s86 = sor.u32 %s84, %s85
      %p87 = scmp.eq.s32.totalorder %s86, 0
      %s89 = sadd.s32 %s88, 1
      %s90 = scalar_select %p87, %s88, %s89
      %p93 = pneg %p87
      %p94 = scmp.eq.s32.totalorder %s15, 1
      %p95 = por %p93, %p94
      %p96 = scmp.ne.s32.totalorder %s88, %s91
      %p97 = scmp.eq.s32.totalorder %s15, 0
      %p98 = por %p96, %p97
      %p99 = scmp.ne.s32.totalorder %s88, %s91
      %p100 = scmp.eq.s32.totalorder %s20, 1
      %p101 = por %p99, %p100
      %p102 = scmp.ne.s32.totalorder %s91, %s92
      %p103 = scmp.eq.s32.totalorder %s20, 0
      %p104 = por %p102, %p103
      %p105 = scmp.ne.s32.totalorder %s91, %s92
      %p106 = scmp.eq.s32.totalorder %s21, 1
      %p107 = por %p105, %p106
      %p109 = scmp.ne.s32.totalorder %s92, %s108
      %p110 = scmp.eq.s32.totalorder %s21, 0
      %p111 = por %p109, %p110
      %p112 = scmp.le.s32.totalorder 1, %s15
      %p113 = scmp.lt.s32.totalorder %s15, 3
      %p114 = pnand %p112, %p113
      %p115 = pneg %p114
      // Predicated region
      $region9: #{tpu_custom_call.1} parent=5 // pred_check
        _
      $region10: #{tpu_custom_call.1} parent=5 // pred_check_branch
        %117 = sbr.rel (%p114) target = $region12
      $region11: #{tpu_custom_call.1} parent=5 // pred_region
        %s118 = ssub.s32 %s15, 1
        // Predicated region
        $region13: #{tpu_custom_call.1} parent=11 // pred_check
          %p119 = pneg %p48
        $region14: #{tpu_custom_call.1} parent=11 // pred_check_branch
          %121 = sbr.rel (%p119) target = $region16
        $region15: #{tpu_custom_call.1} parent=11 // pred_region
          %123 = vsyncadd [#allocation5], 0
          %s125 = sshll.u32 %s0, 4
          %s126 = int_to_ptr.hbm [resolvable:$true] %s125
          %128 = dma.hbm_to_smem %s126, 32, [#allocation2], [#allocation5]
        $region16: #{tpu_custom_call.1} parent=11 // pred_fallthru
          _
      $region12: #{tpu_custom_call.1} parent=5 // pred_fallthru
        _
      %p129 = scmp.lt.s32.totalorder %s15, 2
      // Predicated region
      $region17: #{tpu_custom_call.1} parent=5 // pred_check
        %p130 = pneg %p129
      $region18: #{tpu_custom_call.1} parent=5 // pred_check_branch
        %132 = sbr.rel (%p130) target = $region20
      $region19: #{tpu_custom_call.1} parent=5 // pred_region
        // Predicated region
        $region21: #{tpu_custom_call.1} parent=19 // pred_check
          %p133 = pneg %p70
        $region22: #{tpu_custom_call.1} parent=19 // pred_check_branch
          %135 = sbr.rel (%p133) target = $region24
        $region23: #{tpu_custom_call.1} parent=19 // pred_region
          %s136 = sand.u32 %s60, 1
          %s137 = scalar_lea.sflag [#allocation3], %s136
          %s138 = sand.u32 %s60, 1
          %s139 = smul.addr %s138, 2
          %s140 = scalar_lea.vmem [#allocation6], %s139
          %s141 = smul.u32 2, %s23
          %143 = vsyncadd %s137, 0
          %s144 = smul.addr %s22, 2
          %s145 = sadd.s32 %s141, %s144
          %s146 = scalar_lea.hbm %s1, %s145
          %s148 = sshll.u32 %s146, 4
          %s149 = int_to_ptr.hbm [resolvable:$true] %s148
          %s150 = sshll.u32 %s140, 4
          %s151 = int_to_ptr.vmem [resolvable:$true] %s150
          %153 = dma.hbm_to_vmem [thread:$0]  %s149, 32, %s151, %s137
        $region24: #{tpu_custom_call.1} parent=19 // pred_fallthru
          _
      $region20: #{tpu_custom_call.1} parent=5 // pred_fallthru
        _
      %p154 = scmp.le.s32.totalorder 1, %s15
      %p155 = scmp.lt.s32.totalorder %s15, 3
      %p156 = pnand %p154, %p155
      %p157 = pneg %p156
      // Predicated region
      $region25: #{tpu_custom_call.1} parent=5 // pred_check
        _
      $region26: #{tpu_custom_call.1} parent=5 // pred_check_branch
        %159 = sbr.rel (%p156) target = $region28
      $region27: #{tpu_custom_call.1} parent=5 // pred_region
        %s160 = ssub.s32 %s15, 1
        // Predicated region
        $region29: #{tpu_custom_call.1} parent=27 // pred_check
          %p161 = pneg %p48
        $region30: #{tpu_custom_call.1} parent=27 // pred_check_branch
          %163 = sbr.rel (%p161) target = $region32
        $region31: #{tpu_custom_call.1} parent=27 // pred_region
          %165 = dma.done [#allocation5], 32
        $region32: #{tpu_custom_call.1} parent=27 // pred_fallthru
          _
        %s166 = sand.u32 %s63, 1
        %s167 = scalar_lea.sflag [#allocation3], %s166
        %s168 = sand.u32 %s63, 1
        %s169 = smul.addr %s168, 2
        %s170 = scalar_lea.vmem [#allocation6], %s169
        // Predicated region
        $region33: #{tpu_custom_call.1} parent=27 // pred_check
          %p171 = pneg %p76
        $region34: #{tpu_custom_call.1} parent=27 // pred_check_branch
          %173 = sbr.rel (%p171) target = $region36
        $region35: #{tpu_custom_call.1} parent=27 // pred_region
          %175 = dma.done %s167, 32
        $region36: #{tpu_custom_call.1} parent=27 // pred_fallthru
          _
        %176 = sfence
        %p177 = pneg %p48
        %p178 = pneg %p45
        %s179 = sand.u32 %s63, 1
        %s180 = scalar_lea.sflag [#allocation3], %s179
        %s181 = sand.u32 %s63, 1
        %s182 = smul.addr %s181, 2
        %s183 = scalar_lea.vmem [#allocation6], %s182
        %p184 = pneg %p76
        %p185 = pneg %p73
        %p186 = pneg %p104
        %p187 = pneg %p101
        %s188 = sand.u32 %s91, 1
        %s189 = scalar_lea.sflag [#allocation4], %s188
        %s190 = sand.u32 %s91, 1
        %s191 = smul.addr %s190, 8
        %s192 = scalar_lea.vmem [#allocation7], %s191
        %s193 = smul.u32 2, %s25
        %s194 = smul.u32 2, %s25
        %s195 = smul.u32 %s25, 256
        %v196 = vlaneseq
        %v197 = vand.u32 %v196, 127
        %v198 = vadd.s32 %v197, 128
        %v199 = vstv %s195
        %v200 = vadd.s32 %v197, %v199
        %v201 = vadd.s32 %v198, %v199
        %v202 = vand.u32 %v200, 15
        %v203 = vand.u32 %v201, 15
        %v204 = vcvt.s32.f32 %v202
        %v205 = vcvt.s32.f32 %v203
        %v206 = vshra.s32 %v200, 4
        %v207 = vshra.s32 %v201, 4
        %v208 = vcvt.s32.f32 %v206
        %v209 = vcvt.s32.f32 %v207
        %s210 = smul.u32 %s24, 128
        %s211 = sld [smem:[#allocation2 + %s210]]
        %s212 = sadd.s32 %s210, 1
        %s213 = sld [smem:[#allocation2 + %s212]]
        %s214 = sadd.s32 %s210, 2
        %s215 = sld [smem:[#allocation2 + %s214]]
        %s216 = sadd.s32 %s210, 3
        %s217 = sld [smem:[#allocation2 + %s216]]
        %s218 = sadd.s32 %s210, 4
        %s219 = sld [smem:[#allocation2 + %s218]]
        %s220 = sadd.s32 %s210, 5
        %s221 = sld [smem:[#allocation2 + %s220]]
        %s222 = sadd.s32 %s210, 6
        %s223 = sld [smem:[#allocation2 + %s222]]
        %s224 = sadd.s32 %s210, 7
        %s225 = sld [smem:[#allocation2 + %s224]]
        %s226 = sadd.s32 %s210, 8
        %s227 = sld [smem:[#allocation2 + %s226]]
        %v228 = vld [vmem:[%s170] sm:$0x3]
        %v229 = vstv %s211
        %v230 = vmul.f32 %v229, %v204
        %v231 = vmul.f32 %v229, %v205
        %v232 = vstv %s213
        %v233 = vmul.f32 %v232, %v208
        %v234 = vmul.f32 %v232, %v209
        %v235 = vadd.f32 %v230, %v233
        %v236 = vadd.f32 %v231, %v234
        %v237 = vstv %s215
        %v238 = vadd.f32 %v235, %v237
        %v239 = vadd.f32 %v236, %v237
        %v242 = vrot.slane %v239, 7
        %vm243 = vcmask 1040384
        %v244 = vsel %vm243, %v238, %v242
        %v246 = vmul.f32 %v228, %v244
        %v247 = vlaneseq
        %vm248 = vcmp.ge.s32.totalorder %v247, 0
        %vm249 = vcmp.lt.s32.totalorder %v247, 256
        %vm250 = vmand %vm248, %vm249
        %251 = vst.msk [vmem:[%s192] ss:$4 sm:$0x3] %vm250, %v246
        %v252 = vstv %s217
        %v253 = vmul.f32 %v252, %v204
        %v254 = vmul.f32 %v252, %v205
        %v255 = vstv %s219
        %v256 = vmul.f32 %v255, %v208
        %v257 = vmul.f32 %v255, %v209
        %v258 = vadd.f32 %v253, %v256
        %v259 = vadd.f32 %v254, %v257
        %v260 = vstv %s221
        %v261 = vadd.f32 %v258, %v260
        %v262 = vadd.f32 %v259, %v260
        %v265 = vrot.slane %v262, 7
        %v266 = vsel %vm243, %v261, %v265
        %v268 = vmul.f32 %v228, %v266
        %s269 = scalar_lea.vmem %s192, 1 [#allocation7]
        %270 = vst.msk [vmem:[%s269] ss:$4 sm:$0x3] %vm250, %v268
        %v271 = vstv %s223
        %v272 = vmul.f32 %v271, %v204
        %v273 = vmul.f32 %v271, %v205
        %v274 = vstv %s225
        %v275 = vmul.f32 %v274, %v208
        %v276 = vmul.f32 %v274, %v209
        %v277 = vadd.f32 %v272, %v275
        %v278 = vadd.f32 %v273, %v276
        %v279 = vstv %s227
        %v280 = vadd.f32 %v277, %v279
        %v281 = vadd.f32 %v278, %v279
        %v284 = vrot.slane %v281, 7
        %v285 = vsel %vm243, %v280, %v284
        %v287 = vmul.f32 %v228, %v285
        %s288 = scalar_lea.vmem %s192, 2 [#allocation7]
        %289 = vst.msk [vmem:[%s288] ss:$4 sm:$0x3] %vm250, %v287
        %s290 = scalar_lea.vmem %s192, 3 [#allocation7]
        %291 = vst.msk [vmem:[%s290] ss:$4 sm:$0x3] %vm250, 1.0
        %s292 = sand.u32 %s91, 1
        %s293 = scalar_lea.sflag [#allocation4], %s292
        %s294 = sand.u32 %s91, 1
        %s295 = smul.addr %s294, 8
        %s296 = scalar_lea.vmem [#allocation7], %s295
        // Predicated region
        $region37: #{tpu_custom_call.1} parent=27 // pred_check
          %p297 = pneg %p101
        $region38: #{tpu_custom_call.1} parent=27 // pred_check_branch
          %299 = sbr.rel (%p297) target = $region40
        $region39: #{tpu_custom_call.1} parent=27 // pred_region
          %s300 = smul.u32 2, %s25
          %302 = vsyncadd %s293, 0
          %s303 = smul.addr %s24, 2
          %s304 = sadd.s32 %s300, %s303
          %s305 = smul.addr %s304, 4
          %s306 = scalar_lea.hbm %s2, %s305
          %s308 = sshll.u32 %s296, 4
          %s309 = int_to_ptr.vmem [resolvable:$true] %s308
          %s310 = sshll.u32 %s306, 4
          %s311 = int_to_ptr.hbm [resolvable:$true] %s310
          %313 = dma.vmem_to_hbm [thread:$0]  %s309, 128, %s311, %s293
        $region40: #{tpu_custom_call.1} parent=27 // pred_fallthru
          _
      $region28: #{tpu_custom_call.1} parent=5 // pred_fallthru
        _
      %p314 = scmp.le.s32.totalorder 2, %s15
      // Predicated region
      $region41: #{tpu_custom_call.1} parent=5 // pred_check
        %p315 = pneg %p314
      $region42: #{tpu_custom_call.1} parent=5 // pred_check_branch
        %317 = sbr.rel (%p315) target = $region44
      $region43: #{tpu_custom_call.1} parent=5 // pred_region
        %s318 = ssub.s32 %s15, 2
        // Predicated region
        $region45: #{tpu_custom_call.1} parent=43 // pred_check
          %p319 = pneg %p107
        $region46: #{tpu_custom_call.1} parent=43 // pred_check_branch
          %321 = sbr.rel (%p319) target = $region48
        $region47: #{tpu_custom_call.1} parent=43 // pred_region
          %s322 = sand.u32 %s92, 1
          %s323 = scalar_lea.sflag [#allocation4], %s322
          %s324 = sand.u32 %s92, 1
          %s325 = smul.addr %s324, 8
          %s326 = scalar_lea.vmem [#allocation7], %s325
          %328 = dma.done %s323, 128
        $region48: #{tpu_custom_call.1} parent=43 // pred_fallthru
          _
      $region44: #{tpu_custom_call.1} parent=5 // pred_fallthru
        _
    $region6: #{tpu_custom_call.1} parent=1 // loop_footer
      %s19 = sadd.s32 1, %s15
    $region7: #{tpu_custom_call.1} parent=1 // loop_footer_branch
      %14 = sbr.rel target = $region3
    $region8: #{tpu_custom_call.1} parent=1 // loop_exit
      _
    %329 = vsyncpa [#allocation3], 1
    %s330 = scalar_lea.sflag [#allocation3], 1
    %331 = vsyncpa %s330, 1
    %332 = vsyncpa [#allocation4], 1
    %s333 = scalar_lea.sflag [#allocation4], 1
    %334 = vsyncpa %s333, 1
    %335 = vsyncpa [#allocation5], 1
    %s336 = scalar_lea.sflag [#allocation5], 1
    %337 = vsyncpa %s336, 1

</llo_original>
